<compile_context>
chip_gen: v5e
topology: v5e:2x2
jax: 0.10.0
libtpu: 0.0.40
codegen_flags: <defaults>
</compile_context>

<pallas_src>
import functools

import jax
import jax.numpy as jnp
from jax.experimental import pallas as pl
from jax.experimental.pallas import tpu as pltpu


def _conv_bn_silu_kernel(x_ref, w_ref, shift_ref, o_ref):
    """One (batch, row-tile) grid step.

    x_ref:     (1, Hp, W*Cin)      bf16  H-padded input image (constant block over
                                         the row axis -> DMA'd once per batch)
    w_ref:     (KH, W*Cin, W*Cout) bf16  block-Toeplitz conv weights, BN scale folded
    shift_ref: (1, W*Cout)         f32   folded BN shift (per channel, tiled over W)
    o_ref:     (1, TH, W*Cout)     bf16  output row tile (lane-dense last dim)
    """
    KH = w_ref.shape[0]
    TH = o_ref.shape[1]

    # Aligned base row for this tile; one slab load, taps are static slices.
    row0 = pl.multiple_of(pl.program_id(1) * TH, TH)
    xs = x_ref[0, pl.ds(row0, TH + KH - 1), :]            # (TH+KH-1, W*Cin) bf16

    # KH matmuls on the MXU with f32 accumulation; acc initialized by the kh=0 dot
    # and the add-chain kept fusible (v7x MRB in-place accumulation).
    acc = jnp.dot(xs[0:TH], w_ref[0], preferred_element_type=jnp.float32)
    for kh in range(1, KH):                                # static python loop (KH=3)
        acc = acc + jnp.dot(xs[kh:kh + TH], w_ref[kh],
                            preferred_element_type=jnp.float32)

    # Fused eval-mode BatchNorm shift (scale already folded into weights) + SiLU.
    y = acc + shift_ref[...]
    y = y * jax.nn.sigmoid(y)
    o_ref[0] = y.astype(o_ref.dtype)


def _pack_toeplitz_scaled(w_hwio, W, pad, bn_scale):
    """Pack (KH, KW, Cin, Cout) conv weights into (KH, W*Cin, W*Cout) block-Toeplitz
    over the *unpadded* W axis, folding the BN scale into the output columns.

    toep[kh, wi*Cin + ci, wo*Cout + co] =
        w_hwio[kh, wi - wo + pad, ci, co] * bn_scale[co]   if 0 <= wi - wo + pad < KW
        0                                                   otherwise
    """
    KH, KW, Cin, Cout = w_hwio.shape
    wi = jnp.arange(W)[:, None]                           # input column
    wo = jnp.arange(W)[None, :]                           # output column
    kw = wi - wo + pad                                    # (W, W) tap index
    valid = (kw >= 0) & (kw < KW)
    kw_c = jnp.clip(kw, 0, KW - 1)
    g = w_hwio[:, kw_c]                                   # (KH, W, W, Cin, Cout)
    g = jnp.where(valid[None, :, :, None, None], g, 0.0)
    g = g * bn_scale[None, None, None, None, :]           # fold BN scale (f32)
    g = jnp.transpose(g, (0, 1, 3, 2, 4))                 # (KH, Wi, Cin, Wo, Cout)
    return g.reshape(KH, W * Cin, W * Cout)


@functools.partial(jax.jit, static_argnames=("k", "pad"))
def conv_bn_silu(x_nchw, weight, bn_scale, bn_shift, *, k, pad):
    """x_nchw: (N, Cin, H, W); weight: (Cout, Cin, KH, KW); bn_scale/shift: (Cout,)."""
    N, Cin, H, W = x_nchw.shape
    Cout = weight.shape[0]
    KH = KW = k
    Hp = H + 2 * pad
    WC = W * Cout

    if W * Cin > 256:
        # TODO(synk): Cin-deep fallback path for large W*Cin (see header).
        raise NotImplementedError("width-folded Toeplitz pack requires W*Cin <= 256")

    # Row tile: as many rows per grid step as possible (multiple of 8, <= 128).
    if H % 8 == 0:
        TH = H if H <= 128 else max(t for t in range(8, 129, 8) if H % t == 0)
    else:
        TH = H
    n_row_tiles = H // TH

    # ---- wrapper glue: layout, H-only zero-padding, dtype, weight packing -------
    x_nhwc = jnp.transpose(x_nchw, (0, 2, 3, 1))                   # (N, H, W, Cin)
    x_pad = jnp.pad(x_nhwc, ((0, 0), (pad, pad), (0, 0), (0, 0)))  # pad H only
    x_in = x_pad.reshape(N, Hp, W * Cin).astype(jnp.bfloat16)

    w_hwio = jnp.transpose(weight, (2, 3, 1, 0)).astype(jnp.float32)
    w_toep = _pack_toeplitz_scaled(
        w_hwio, W, pad, bn_scale.astype(jnp.float32)).astype(jnp.bfloat16)

    shift_wc = jnp.tile(bn_shift.astype(jnp.float32), W).reshape(1, WC)

    # VMEM budget: ~75% of this generation's capacity (v7x 64 MiB vs v5e/v6e 128 MiB).
    try:
        vmem_cap = pltpu.get_tpu_info().vmem_capacity_bytes
        vmem_limit = min(int(0.75 * vmem_cap), 100 * 1024 * 1024)
    except Exception:
        vmem_limit = 48 * 1024 * 1024

    cost = pl.CostEstimate(
        flops=2 * N * H * W * KH * KW * Cin * Cout,
        transcendentals=N * H * W * Cout,
        bytes_accessed=(x_in.size * 2 + w_toep.size * 2
                        + shift_wc.size * 4 + N * H * WC * 2),
    )

    out_slab = pl.pallas_call(
        _conv_bn_silu_kernel,
        out_shape=jax.ShapeDtypeStruct((N, H, WC), jnp.bfloat16),
        grid=(N, n_row_tiles),
        in_specs=[
            pl.BlockSpec((1, Hp, W * Cin), lambda n, h: (n, 0, 0)),    # per-batch image
            pl.BlockSpec((KH, W * Cin, WC), lambda n, h: (0, 0, 0)),   # packed weights
            pl.BlockSpec((1, WC), lambda n, h: (0, 0)),                # bn shift
        ],
        out_specs=pl.BlockSpec((1, TH, WC), lambda n, h: (n, h, 0)),
        compiler_params=pltpu.CompilerParams(
            dimension_semantics=("parallel", "parallel"),
            vmem_limit_bytes=vmem_limit,
        ),
        cost_estimate=cost,
    )(x_in, w_toep, shift_wc)

    # TODO(synk): callers that can consume NHWC bf16 should take out_slab directly
    # and skip this transpose/convert pass (kept here to match the module's NCHW).
    out_nhwc = out_slab.reshape(N, H, W, Cout)
    return jnp.transpose(out_nhwc, (0, 3, 1, 2)).astype(jnp.float32)


def _reference(x_nchw, weight, gamma, beta, mean, var, eps, pad):
    """Pure-JAX reference matching the kernel's dtype strategy (bf16 in, f32 acc)."""
    xq = x_nchw.astype(jnp.bfloat16).astype(jnp.float32)
    wq = weight.astype(jnp.bfloat16).astype(jnp.float32)
    y = jax.lax.conv_general_dilated(
        xq, wq,
        window_strides=(1, 1),
        padding=((pad, pad), (pad, pad)),
        dimension_numbers=("NCHW", "OIHW", "NCHW"),
        precision=jax.lax.Precision.HIGHEST,
    )
    g = gamma.reshape(1, -1, 1, 1)
    b = beta.reshape(1, -1, 1, 1)
    m = mean.reshape(1, -1, 1, 1)
    v = var.reshape(1, -1, 1, 1)
    y = (y - m) / jnp.sqrt(v + eps) * g + b
    return y * jax.nn.sigmoid(y)


if __name__ == "__main__":
    # Module config: Conv(c1=4, c2=8, k=3, s=1) -> autopad gives p=1 ('same').
    c1, c2, k, pad = 4, 8, 3, 1
    N, H, W = 2, 16, 16
    eps = 1e-5  # PyTorch BatchNorm2d default

    key = jax.random.PRNGKey(0)
    kx, kw, kg, kb, km, kv = jax.random.split(key, 6)

    x = jax.random.normal(kx, (N, c1, H, W), jnp.float32)
    # nn.Conv2d weight shape: (c2, c1/g, k, k), bias=False
    weight = jax.random.normal(kw, (c2, c1, k, k), jnp.float32) * 0.1
    # BatchNorm2d parameters / running stats (deterministic, non-trivial)
    gamma = 1.0 + 0.1 * jax.random.normal(kg, (c2,), jnp.float32)
    beta = 0.1 * jax.random.normal(kb, (c2,), jnp.float32)
    running_mean = 0.05 * jax.random.normal(km, (c2,), jnp.float32)
    running_var = jax.random.uniform(kv, (c2,), jnp.float32, 0.5, 1.5)

    # Fold eval-mode BN into per-channel scale/shift (scale goes into the weights).
    bn_scale = gamma / jnp.sqrt(running_var + eps)
    bn_shift = beta - running_mean * bn_scale

    out = conv_bn_silu(x, weight, bn_scale, bn_shift, k=k, pad=pad)
    out = jax.block_until_ready(out)

    ref = _reference(x, weight, gamma, beta, running_mean, running_var, eps, pad)
    assert out.shape == (N, c2, H, W), out.shape
    err = float(jnp.max(jnp.abs(out - ref)))
    # bf16 output + scale-folded bf16 weights -> slightly looser tolerance than f32.
    assert jnp.allclose(out, ref, atol=3e-2, rtol=3e-2), err

    print("KERNEL_OK")
</pallas_src>

<mosaic_0001>
module attributes {stable_mosaic.version = 11 : i64} {
  func.func @_conv_bn_silu_kernel(%arg0: i32, %arg1: i32, %arg2: memref<1x18x64xbf16, #tpu.memory_space<vmem>>, %arg3: memref<3x64x128xbf16, #tpu.memory_space<vmem>>, %arg4: memref<1x128xf32, #tpu.memory_space<vmem>>, %arg5: memref<1x16x128xbf16, #tpu.memory_space<vmem>>) attributes {dimension_semantics = [#tpu.dimension_semantics<parallel>, #tpu.dimension_semantics<parallel>], iteration_bounds = array<i64: 2, 1>, scalar_prefetch = 0 : i64, scratch_operands = 0 : i64, tpu.core_type = #tpu.core_type<tc>, window_params = [{transform_indices = @transform_0, window_bounds = array<i64: 1, 18, 64>}, {pipeline_mode = #tpu.pipeline_mode<synchronous>, transform_indices = @transform_1, window_bounds = array<i64: 3, 64, 128>}, {pipeline_mode = #tpu.pipeline_mode<synchronous>, transform_indices = @transform_2, window_bounds = array<i64: 1, 128>}, {transform_indices = @transform_3, window_bounds = array<i64: 1, 16, 128>}]} {
    %c16_i32 = arith.constant 16 : i32
    %0 = arith.muli %arg1, %c16_i32 : i32
    %1 = tpu.assume_multiple %0, 16 : i32
    %c0 = arith.constant 0 : index
    %2 = arith.index_cast %1 : i32 to index
    %c0_0 = arith.constant 0 : index
    %3 = vector.load %arg2[%c0, %2, %c0_0] : memref<1x18x64xbf16, #tpu.memory_space<vmem>>, vector<1x18x64xbf16>
    %4 = vector.shape_cast %3 : vector<1x18x64xbf16> to vector<18x64xbf16>
    %5 = vector.extract_strided_slice %4 {offsets = [0, 0], sizes = [16, 64], strides = [1, 1]} : vector<18x64xbf16> to vector<16x64xbf16>
    %c0_1 = arith.constant 0 : index
    %c0_2 = arith.constant 0 : index
    %c0_3 = arith.constant 0 : index
    %6 = vector.load %arg3[%c0_1, %c0_2, %c0_3] : memref<3x64x128xbf16, #tpu.memory_space<vmem>>, vector<1x64x128xbf16>
    %7 = vector.shape_cast %6 : vector<1x64x128xbf16> to vector<64x128xbf16>
    %cst = arith.constant dense<0.000000e+00> : vector<16x128xf32>
    %8 = tpu.matmul %5, %7, %cst {dimension_numbers = #tpu.dot_dimension_numbers<[1], [0], [0], [1], [0, 0, 1, 1], [], []>} : vector<16x64xbf16>, vector<64x128xbf16>, vector<16x128xf32> -> vector<16x128xf32>
    %9 = vector.extract_strided_slice %4 {offsets = [1, 0], sizes = [16, 64], strides = [1, 1]} : vector<18x64xbf16> to vector<16x64xbf16>
    %c1 = arith.constant 1 : index
    %c0_4 = arith.constant 0 : index
    %c0_5 = arith.constant 0 : index
    %10 = vector.load %arg3[%c1, %c0_4, %c0_5] : memref<3x64x128xbf16, #tpu.memory_space<vmem>>, vector<1x64x128xbf16>
    %11 = vector.shape_cast %10 : vector<1x64x128xbf16> to vector<64x128xbf16>
    %cst_6 = arith.constant dense<0.000000e+00> : vector<16x128xf32>
    %12 = tpu.matmul %9, %11, %cst_6 {dimension_numbers = #tpu.dot_dimension_numbers<[1], [0], [0], [1], [0, 0, 1, 1], [], []>} : vector<16x64xbf16>, vector<64x128xbf16>, vector<16x128xf32> -> vector<16x128xf32>
    %13 = arith.addf %8, %12 : vector<16x128xf32>
    %14 = vector.extract_strided_slice %4 {offsets = [2, 0], sizes = [16, 64], strides = [1, 1]} : vector<18x64xbf16> to vector<16x64xbf16>
    %c2 = arith.constant 2 : index
    %c0_7 = arith.constant 0 : index
    %c0_8 = arith.constant 0 : index
    %15 = vector.load %arg3[%c2, %c0_7, %c0_8] : memref<3x64x128xbf16, #tpu.memory_space<vmem>>, vector<1x64x128xbf16>
    %16 = vector.shape_cast %15 : vector<1x64x128xbf16> to vector<64x128xbf16>
    %cst_9 = arith.constant dense<0.000000e+00> : vector<16x128xf32>
    %17 = tpu.matmul %14, %16, %cst_9 {dimension_numbers = #tpu.dot_dimension_numbers<[1], [0], [0], [1], [0, 0, 1, 1], [], []>} : vector<16x64xbf16>, vector<64x128xbf16>, vector<16x128xf32> -> vector<16x128xf32>
    %18 = arith.addf %13, %17 : vector<16x128xf32>
    %c0_10 = arith.constant 0 : index
    %c0_11 = arith.constant 0 : index
    %19 = vector.load %arg4[%c0_10, %c0_11] : memref<1x128xf32, #tpu.memory_space<vmem>>, vector<1x128xf32>
    %20 = vector.broadcast %19 : vector<1x128xf32> to vector<16x128xf32>
    %21 = arith.addf %18, %20 : vector<16x128xf32>
    %22 = arith.negf %21 : vector<16x128xf32>
    %23 = math.exp %22 : vector<16x128xf32>
    %cst_12 = arith.constant 1.000000e+00 : f32
    %24 = vector.broadcast %cst_12 : f32 to vector<16x128xf32>
    %25 = arith.addf %24, %23 : vector<16x128xf32>
    %26 = arith.divf %24, %25 : vector<16x128xf32>
    %27 = arith.mulf %21, %26 : vector<16x128xf32>
    %28 = arith.truncf %27 : vector<16x128xf32> to vector<16x128xbf16>
    %c0_13 = arith.constant 0 : index
    %c0_14 = arith.constant 0 : index
    %c0_15 = arith.constant 0 : index
    %29 = vector.load %arg5[%c0_13, %c0_14, %c0_15] : memref<1x16x128xbf16, #tpu.memory_space<vmem>>, vector<1x16x128xbf16>
    %30 = vector.shape_cast %29 : vector<1x16x128xbf16> to vector<16x128xbf16>
    %31 = vector.shape_cast %28 : vector<16x128xbf16> to vector<1x16x128xbf16>
    tpu.vector_store %arg5[%c0_13, %c0_14, %c0_15], %31 {strides = array<i32>} : memref<1x16x128xbf16, #tpu.memory_space<vmem>>, vector<1x16x128xbf16>,
    return
  }
  func.func @transform_0(%arg0: i32, %arg1: i32) -> (i32, i32, i32) {
    %c0_i32 = arith.constant 0 : i32
    %c0_i32_0 = arith.constant 0 : i32
    %c0_i32_1 = arith.constant 0 : i32
    return %arg0, %c0_i32, %c0_i32_0 : i32, i32, i32
  }
  func.func @transform_1(%arg0: i32, %arg1: i32) -> (i32, i32, i32) {
    %c0_i32 = arith.constant 0 : i32
    %c0_i32_0 = arith.constant 0 : i32
    %c0_i32_1 = arith.constant 0 : i32
    %c0_i32_2 = arith.constant 0 : i32
    return %c0_i32, %c0_i32_0, %c0_i32_1 : i32, i32, i32
  }
  func.func @transform_2(%arg0: i32, %arg1: i32) -> (i32, i32) {
    %c0_i32 = arith.constant 0 : i32
    %c0_i32_0 = arith.constant 0 : i32
    %c0_i32_1 = arith.constant 0 : i32
    return %c0_i32, %c0_i32_0 : i32, i32
  }
  func.func @transform_3(%arg0: i32, %arg1: i32) -> (i32, i32, i32) {
    %c0_i32 = arith.constant 0 : i32
    %c0_i32_0 = arith.constant 0 : i32
    return %arg0, %arg1, %c0_i32 : i32, i32, i32
  }
}

</mosaic_0001>

<llo_original>
// kernel: tile.8
$region0: #{tile.8}
  #allocation0 [shape = 's32[1]{0}', space=sflag, size = 0x4, scoped, tag = 'scoped memory for tile.8']
  %s0 = inlined_call_operand.vmem [shape: f32[8], index: 0, kind: input, shape index: {}]
  %s1 = inlined_call_operand.vmem [shape: f32[16,8], index: 1, kind: output, shape index: {}]
  // Predicated region
  $region2: #{tile.8} parent=0 // pred_check
    _
  $region3: #{tile.8} parent=0 // pred_check_branch
    %3 = sbr.rel (0) target = $region5
  $region4: #{tile.8} parent=0 // pred_region
    _
  $region5: #{tile.8} parent=0 // pred_fallthru
    _
  %v4 = vld [vmem:[%s0] ss:$0 sm:$0xff]
  %5 = vst [vmem:[%s1] sm:$0xff] %v4
  %s6 = scalar_lea.vmem %s1, 8
  %7 = vst [vmem:[%s6] sm:$0xff] %v4

// kernel: tile.9
$region0: #{tile.9}
  %s0 = inlined_call_operand.vmem [shape: f32[16,8], index: 0, kind: input, shape index: {}]
  %s1 = inlined_call_operand.vmem [shape: f32[1,128], index: 1, kind: output, shape index: {}]
  $region1: #{tile.9} parent=0
    #allocation0 [shape = 'u8[4096]{0}', space=vmem, size = 0x1000, scoped, tag = 'scoped mem for output reshape']
    %v2 = vld [vmem:[%s0] sm:$0x1]
    %vm3 = vcmask 64512
    %4 = vst.msk [vmem:[#allocation0] sm:$0x1] %vm3, %v2
    %s5 = scalar_lea.vmem %s0, 15
    %v6 = vld [vmem:[%s5] sm:$0x1]
    %7 = vrot.lane.b32.xlu0 %v6, 120
    %v8 = vpop.permute.xlu0 %7
    %vm9 = vcmask 1048512
    %10 = vst.msk [vmem:[#allocation0] sm:$0x1] %vm9, %v8
    %s11 = scalar_lea.vmem %s0, 14
    %v12 = vld [vmem:[%s11] sm:$0x1]
    %13 = vrot.lane.b32.xlu0 %v12, 112
    %v14 = vpop.permute.xlu0 %13
    %vm15 = vcmask 982912
    %16 = vst.msk [vmem:[#allocation0] sm:$0x1] %vm15, %v14
    %s17 = scalar_lea.vmem %s0, 13
    %v18 = vld [vmem:[%s17] sm:$0x1]
    %19 = vrot.lane.b32.xlu0 %v18, 104
    %v20 = vpop.permute.xlu0 %19
    %vm21 = vcmask 917312
    %22 = vst.msk [vmem:[#allocation0] sm:$0x1] %vm21, %v20
    %s23 = scalar_lea.vmem %s0, 12
    %v24 = vld [vmem:[%s23] sm:$0x1]
    %25 = vrot.lane.b32.xlu0 %v24, 96
    %v26 = vpop.permute.xlu0 %25
    %vm27 = vcmask 851712
    %28 = vst.msk [vmem:[#allocation0] sm:$0x1] %vm27, %v26
    %s29 = scalar_lea.vmem %s0, 11
    %v30 = vld [vmem:[%s29] sm:$0x1]
    %31 = vrot.lane.b32.xlu0 %v30, 88
    %v32 = vpop.permute.xlu0 %31
    %vm33 = vcmask 786112
    %34 = vst.msk [vmem:[#allocation0] sm:$0x1] %vm33, %v32
    %s35 = scalar_lea.vmem %s0, 10
    %v36 = vld [vmem:[%s35] sm:$0x1]
    %37 = vrot.lane.b32.xlu0 %v36, 80
    %v38 = vpop.permute.xlu0 %37
    %vm39 = vcmask 720512
    %40 = vst.msk [vmem:[#allocation0] sm:$0x1] %vm39, %v38
    %s41 = scalar_lea.vmem %s0, 9
    %v42 = vld [vmem:[%s41] sm:$0x1]
    %43 = vrot.lane.b32.xlu0 %v42, 72
    %v44 = vpop.permute.xlu0 %43
    %vm45 = vcmask 654912
    %46 = vst.msk [vmem:[#allocation0] sm:$0x1] %vm45, %v44
    %s47 = scalar_lea.vmem %s0, 8
    %v48 = vld [vmem:[%s47] sm:$0x1]
    %49 = vrot.lane.b32.xlu0 %v48, 64
    %v50 = vpop.permute.xlu0 %49
    %vm51 = vcmask 589312
    %52 = vst.msk [vmem:[#allocation0] sm:$0x1] %vm51, %v50
    %s53 = scalar_lea.vmem %s0, 7
    %v54 = vld [vmem:[%s53] sm:$0x1]
    %55 = vrot.lane.b32.xlu0 %v54, 56
    %v56 = vpop.permute.xlu0 %55
    %vm57 = vcmask 523712
    %58 = vst.msk [vmem:[#allocation0] sm:$0x1] %vm57, %v56
    %s59 = scalar_lea.vmem %s0, 6
    %v60 = vld [vmem:[%s59] sm:$0x1]
    %61 = vrot.lane.b32.xlu0 %v60, 48
    %v62 = vpop.permute.xlu0 %61
    %vm63 = vcmask 458112
    %64 = vst.msk [vmem:[#allocation0] sm:$0x1] %vm63, %v62
    %s65 = scalar_lea.vmem %s0, 5
    %v66 = vld [vmem:[%s65] sm:$0x1]
    %67 = vrot.lane.b32.xlu0 %v66, 40
    %v68 = vpop.permute.xlu0 %67
    %vm69 = vcmask 392512
    %70 = vst.msk [vmem:[#allocation0] sm:$0x1] %vm69, %v68
    %s71 = scalar_lea.vmem %s0, 4
    %v72 = vld [vmem:[%s71] sm:$0x1]
    %73 = vrot.lane.b32.xlu0 %v72, 32
    %v74 = vpop.permute.xlu0 %73
    %vm75 = vcmask 326912
    %76 = vst.msk [vmem:[#allocation0] sm:$0x1] %vm75, %v74
    %s77 = scalar_lea.vmem %s0, 3
    %v78 = vld [vmem:[%s77] sm:$0x1]
    %79 = vrot.lane.b32.xlu0 %v78, 24
    %v80 = vpop.permute.xlu0 %79
    %vm81 = vcmask 261312
    %82 = vst.msk [vmem:[#allocation0] sm:$0x1] %vm81, %v80
    %s83 = scalar_lea.vmem %s0, 2
    %v84 = vld [vmem:[%s83] sm:$0x1]
    %85 = vrot.lane.b32.xlu0 %v84, 16
    %v86 = vpop.permute.xlu0 %85
    %vm87 = vcmask 195712
    %88 = vst.msk [vmem:[#allocation0] sm:$0x1] %vm87, %v86
    %s89 = scalar_lea.vmem %s0, 1
    %v90 = vld [vmem:[%s89] sm:$0x1]
    %91 = vrot.lane.b32.xlu0 %v90, 8
    %v92 = vpop.permute.xlu0 %91
    %vm93 = vcmask 130112
    %94 = vst.msk [vmem:[#allocation0] sm:$0x1] %vm93, %v92
    %s96 = ssub.s32 2, 1
    %v97 = vld [vmem:[#allocation0] sm:%s96]
    %s99 = ssub.s32 2, 1
    %100 = vst [vmem:[%s1] sm:%s99] %v97

// kernel: conv_bn_silu.1
$region0: #{conv_bn_silu.1}
  #allocation0 [shape = 'u32[]', space=smem, size = 0x4, offset = 0x4, fixed_abs, tag = 'smem constant byte address 0x4 - core index']
  #allocation1 [shape = 'u32[72,128]{1,0:T(1,128)}', space=vmem, size = 0x9000, scoped, tag = 'internal scratch']
  %s0 = inlined_call_operand.vmem [shape: bf16[2,18,64], index: 0, kind: input, shape index: {}]
  %s1 = inlined_call_operand.vmem [shape: bf16[3,64,128], index: 1, kind: input, shape index: {}]
  %s2 = inlined_call_operand.vmem [shape: f32[1,128], index: 2, kind: input, shape index: {}]
  %s3 = inlined_call_operand.vmem [shape: bf16[2,16,128], index: 3, kind: output, shape index: {}]
  %s4 = sld [smem:[#allocation0]]
  $region45: #{conv_bn_silu.1} parent=0
    _
  %s6 = ssub.s32 1, %s4
  %s7 = scalar_select 0, %s6, %s4
  loop: start=0, step=1, limit=4
  $region2: #{conv_bn_silu.1} parent=0 // loop_pre_header
    _
  $region3: #{conv_bn_silu.1} parent=0 // loop_header
    %s9 = sphi 0, %s13
    %p10 = scmp.ge.s32.totalorder %s9, 4
    %s16 = sphi 0, %s28
    %s17 = sphi 0, %s24
    %s18 = sphi 0, %s16
    %s19 = sphi 0, %s17
    %s20 = sphi 0, %s18
    %s21 = sphi 0, %s19
    %s31 = sphi 0, %s33
    %s34 = sphi 0, %s31
    %s35 = sphi 0, %s34
    %s51 = sphi 0, %s35
    %s55 = sphi 0, %s55
    %s57 = sphi 0, %s55
    %s58 = sphi 0, %s57
    %s72 = sphi 0, %s58
    %s76 = sphi 0, %s76
    %s78 = sphi 0, %s76
    %s79 = sphi 0, %s78
    %s93 = sphi 0, %s79
    %s101 = sphi 0, %s103
    %s104 = sphi 0, %s101
    %s105 = sphi 0, %s104
    %s121 = sphi 0, %s105
  $region4: #{conv_bn_silu.1} parent=0 // loop_header_branch
    %12 = sbr.rel (%p10) target = $region8
  $region5: #{conv_bn_silu.1} parent=0 // loop_body
    %s14 = ssub.s32 %s9, 1
    %s15 = ssub.s32 %s9, 2
    %s22 = sadd.s32 1, %s17
    %p23 = scmp.ge.s32.totalorder %s22, 1
    %s24 = scalar_select %p23, 0, %s22
    %s25 = sadd.s32 1, %s16
    %s26 = scalar_select %p23, %s25, %s16
    %p27 = scmp.ge.s32.totalorder %s26, 2
    %s28 = scalar_select %p27, 0, %s26
    %s29 = ssub.s32 %s16, %s28
    %p30 = scmp.eq.s32.totalorder %s29, 0
    %s32 = sadd.s32 %s31, 1
    %s33 = scalar_select %p30, %s31, %s32
    %p36 = pneg %p30
    %p37 = scmp.eq.s32.totalorder %s9, 1
    %p38 = por %p36, %p37
    %p39 = scmp.ne.s32.totalorder %s31, %s34
    %p40 = scmp.eq.s32.totalorder %s9, 0
    %p41 = por %p39, %p40
    %p42 = scmp.ne.s32.totalorder %s31, %s34
    %p43 = scmp.eq.s32.totalorder %s14, 1
    %p44 = por %p42, %p43
    %p45 = scmp.ne.s32.totalorder %s34, %s35
    %p46 = scmp.eq.s32.totalorder %s14, 0
    %p47 = por %p45, %p46
    %p48 = scmp.ne.s32.totalorder %s34, %s35
    %p49 = scmp.eq.s32.totalorder %s15, 1
    %p50 = por %p48, %p49
    %p52 = scmp.ne.s32.totalorder %s35, %s51
    %p53 = scmp.eq.s32.totalorder %s15, 0
    %p54 = por %p52, %p53
    %s56 = sadd.s32 %s55, 1
    %p59 = scmp.eq.s32.totalorder %s9, 1
    %p60 = scmp.ne.s32.totalorder %s55, %s57
    %p61 = scmp.eq.s32.totalorder %s9, 0
    %p62 = por %p60, %p61
    %p63 = scmp.ne.s32.totalorder %s55, %s57
    %p64 = scmp.eq.s32.totalorder %s14, 1
    %p65 = por %p63, %p64
    %p66 = scmp.ne.s32.totalorder %s57, %s58
    %p67 = scmp.eq.s32.totalorder %s14, 0
    %p68 = por %p66, %p67
    %p69 = scmp.ne.s32.totalorder %s57, %s58
    %p70 = scmp.eq.s32.totalorder %s15, 1
    %p71 = por %p69, %p70
    %p73 = scmp.ne.s32.totalorder %s58, %s72
    %p74 = scmp.eq.s32.totalorder %s15, 0
    %p75 = por %p73, %p74
    %s77 = sadd.s32 %s76, 1
    %p80 = scmp.eq.s32.totalorder %s9, 1
    %p81 = scmp.ne.s32.totalorder %s76, %s78
    %p82 = scmp.eq.s32.totalorder %s9, 0
    %p83 = por %p81, %p82
    %p84 = scmp.ne.s32.totalorder %s76, %s78
    %p85 = scmp.eq.s32.totalorder %s14, 1
    %p86 = por %p84, %p85
    %p87 = scmp.ne.s32.totalorder %s78, %s79
    %p88 = scmp.eq.s32.totalorder %s14, 0
    %p89 = por %p87, %p88
    %p90 = scmp.ne.s32.totalorder %s78, %s79
    %p91 = scmp.eq.s32.totalorder %s15, 1
    %p92 = por %p90, %p91
    %p94 = scmp.ne.s32.totalorder %s79, %s93
    %p95 = scmp.eq.s32.totalorder %s15, 0
    %p96 = por %p94, %p95
    %s97 = ssub.s32 %s16, %s28
    %s98 = ssub.s32 %s17, %s24
    %s99 = sor.u32 %s97, %s98
    %p100 = scmp.eq.s32.totalorder %s99, 0
    %s102 = sadd.s32 %s101, 1
    %s103 = scalar_select %p100, %s101, %s102
    %p106 = pneg %p100
    %p107 = scmp.eq.s32.totalorder %s9, 1
    %p108 = por %p106, %p107
    %p109 = scmp.ne.s32.totalorder %s101, %s104
    %p110 = scmp.eq.s32.totalorder %s9, 0
    %p111 = por %p109, %p110
    %p112 = scmp.ne.s32.totalorder %s101, %s104
    %p113 = scmp.eq.s32.totalorder %s14, 1
    %p114 = por %p112, %p113
    %p115 = scmp.ne.s32.totalorder %s104, %s105
    %p116 = scmp.eq.s32.totalorder %s14, 0
    %p117 = por %p115, %p116
    %p118 = scmp.ne.s32.totalorder %s104, %s105
    %p119 = scmp.eq.s32.totalorder %s15, 1
    %p120 = por %p118, %p119
    %p122 = scmp.ne.s32.totalorder %s105, %s121
    %p123 = scmp.eq.s32.totalorder %s15, 0
    %p124 = por %p122, %p123
    %p125 = scmp.le.s32.totalorder 1, %s9
    %p126 = scmp.lt.s32.totalorder %s9, 3
    %p127 = pnand %p125, %p126
    %p128 = pneg %p127
    // Predicated region
    $region9: #{conv_bn_silu.1} parent=5 // pred_check
      _
    $region10: #{conv_bn_silu.1} parent=5 // pred_check_branch
      %130 = sbr.rel (%p127) target = $region12
    $region11: #{conv_bn_silu.1} parent=5 // pred_region
      %s131 = ssub.s32 %s9, 1
      // Predicated region
      $region13: #{conv_bn_silu.1} parent=11 // pred_check
        %p132 = pneg %p68
      $region14: #{conv_bn_silu.1} parent=11 // pred_check_branch
        %134 = sbr.rel (%p132) target = $region16
      $region15: #{conv_bn_silu.1} parent=11 // pred_region
        _
      $region16: #{conv_bn_silu.1} parent=11 // pred_fallthru
        _
      // Predicated region
      $region17: #{conv_bn_silu.1} parent=11 // pred_check
        %p135 = pneg %p89
      $region18: #{conv_bn_silu.1} parent=11 // pred_check_branch
        %137 = sbr.rel (%p135) target = $region20
      $region19: #{conv_bn_silu.1} parent=11 // pred_region
        _
      $region20: #{conv_bn_silu.1} parent=11 // pred_fallthru
        _
    $region12: #{conv_bn_silu.1} parent=5 // pred_fallthru
      _
    %p138 = scmp.lt.s32.totalorder %s9, 2
    // Predicated region
    $region21: #{conv_bn_silu.1} parent=5 // pred_check
      %p139 = pneg %p138
    $region22: #{conv_bn_silu.1} parent=5 // pred_check_branch
      %141 = sbr.rel (%p139) target = $region24
    $region23: #{conv_bn_silu.1} parent=5 // pred_region
      // Predicated region
      $region25: #{conv_bn_silu.1} parent=23 // pred_check
        %p142 = pneg %p41
      $region26: #{conv_bn_silu.1} parent=23 // pred_check_branch
        %144 = sbr.rel (%p142) target = $region28
      $region27: #{conv_bn_silu.1} parent=23 // pred_region
        %p145 = scmp.lt.s32.totalorder %s16, 1
        %s146 = scalar_select %p145, %s16, 1
        %s147 = smul.addr %s146, 3
        %s148 = smul.addr %s147, 4
        %s149 = scalar_lea.vmem %s0, %s148
      $region28: #{conv_bn_silu.1} parent=23 // pred_fallthru
        _
    $region24: #{conv_bn_silu.1} parent=5 // pred_fallthru
      _
    %p150 = scmp.le.s32.totalorder 1, %s9
    %p151 = scmp.lt.s32.totalorder %s9, 3
    %p152 = pnand %p150, %p151
    %p153 = pneg %p152
    // Predicated region
    $region29: #{conv_bn_silu.1} parent=5 // pred_check
      _
    $region30: #{conv_bn_silu.1} parent=5 // pred_check_branch
      %155 = sbr.rel (%p152) target = $region32
    $region31: #{conv_bn_silu.1} parent=5 // pred_region
      %s156 = ssub.s32 %s9, 1
      %p157 = scmp.lt.s32.totalorder %s18, 1
      %s158 = scalar_select %p157, %s18, 1
      %s159 = smul.addr %s158, 3
      %s160 = smul.addr %s159, 4
      %s161 = scalar_lea.vmem %s0, %s160
      %p162 = pneg %p47
      %p163 = pneg %p44
      %p164 = pneg %p68
      %p165 = pneg %p65
      %p166 = pneg %p89
      %p167 = pneg %p86
      %p168 = pneg %p117
      %p169 = pneg %p114
      %s170 = smul.u32 2, %s19
      %p171 = scmp.lt.s32.totalorder %s18, 1
      %s172 = scalar_select %p171, %s18, 1
      %p173 = scmp.lt.s32.totalorder %s170, 1
      %s174 = scalar_select %p173, %s170, 1
      %s175 = smul.addr %s172, 2
      %s176 = sadd.s32 %s174, %s175
      %s177 = smul.addr %s176, 4
      %s178 = scalar_lea.vmem %s3, %s177
      %p179 = scmp.lt.s32.totalorder %s18, 1
      %s180 = scalar_select %p179, %s18, 1
      %s181 = smul.addr %s180, 3
      %s182 = smul.addr %s181, 4
      %s183 = scalar_lea.vmem %s0, %s182
      %s184 = smul.u32 2, %s19
      %p185 = scmp.lt.s32.totalorder %s18, 1
      %s186 = scalar_select %p185, %s18, 1
      %p187 = scmp.lt.s32.totalorder %s184, 1
      %s188 = scalar_select %p187, %s184, 1
      %s189 = smul.addr %s186, 2
      %s190 = sadd.s32 %s188, %s189
      %s191 = smul.addr %s190, 4
      %s192 = scalar_lea.vmem %s3, %s191
      %s193 = smul.u32 2, %s19
      %s195 = smul.u32 %s19, 16
      %s196 = sshra.s32 %s195, 3
      %s197 = sand.u32 %s195, 7
      %s198 = smul.addr %s196, 4
      %s199 = scalar_lea.vmem %s183, %s198
      %v200 = vld [vmem:[%s199] sm:$0xf]
      %v201 = vld [vmem:[%s199 + $0x4] sm:$0xf]
      %v202 = vld [vmem:[%s199 + $0x8] sm:$0x1]
      %v203 = vld [vmem:[%s1] sm:$0xf]
      %v204 = vld [vmem:[%s1 + $0x4] sm:$0xf]
      %v205 = vld [vmem:[%s1 + $0x8] sm:$0xf]
      %v206 = vld [vmem:[%s1 + $0xc] sm:$0xf]
      %v207 = vld [vmem:[%s1 + $0x10] sm:$0xf]
      %v208 = vld [vmem:[%s1 + $0x14] sm:$0xf]
      %v209 = vld [vmem:[%s1 + $0x18] sm:$0xf]
      %v210 = vld [vmem:[%s1 + $0x1c] sm:$0xf]
      %s211 = scalar_lea.vmem %s1, 32
      %v212 = vld [vmem:[%s211] sm:$0xf]
      %v213 = vld [vmem:[%s211 + $0x4] sm:$0xf]
      %v214 = vld [vmem:[%s211 + $0x8] sm:$0xf]
      %v215 = vld [vmem:[%s211 + $0xc] sm:$0xf]
      %v216 = vld [vmem:[%s211 + $0x10] sm:$0xf]
      %v217 = vld [vmem:[%s211 + $0x14] sm:$0xf]
      %v218 = vld [vmem:[%s211 + $0x18] sm:$0xf]
      %v219 = vld [vmem:[%s211 + $0x1c] sm:$0xf]
      %v223 = vunpack.c.l.b16 %v200
      %v224 = vunpack.c.l.b16 %v201
      %v225 = vunpack.c.l.b16 %v202
      %v226 = vpack.c.b16 %v224, %v223
      %v227 = vpack.c.b16 %v225, %v225
      %vm228 = vsmask.f32 7424
      %v230 = vshrl.u32 %v226, 16
      %v232 = vshll.u32 %v226, 16
      %v234 = vrot.slane %v232, 1
      %v235 = vor.u32 %v230, %v234
      %v237 = vshll.u32 %v227, 16
      %v239 = vrot.slane %v237, 1
      %v240 = vsel %vm228, %v235, %v239
      %v249 = vunpack.c.l.b16 %v212
      %v250 = vunpack.c.l.b16 %v213
      %v251 = vunpack.c.l.b16 %v214
      %v252 = vunpack.c.l.b16 %v215
      %v253 = vunpack.c.l.b16 %v216
      %v254 = vunpack.c.l.b16 %v217
      %v255 = vunpack.c.l.b16 %v218
      %v256 = vunpack.c.l.b16 %v219
      %v257 = vpack.c.b16 %v250, %v249
      %v258 = vpack.c.b16 %v252, %v251
      %v259 = vpack.c.b16 %v254, %v253
      %v260 = vpack.c.b16 %v256, %v255
      %vm265 = vcmask 523264
      %v267 = vsel %vm265, %v240, 0
      %269 = vmatpush.bf16.msra.mxu0 0
      %270 = vmatpush.bf16.msra.mxu0 0
      %271 = vmatpush.bf16.msra.mxu0 0
      %272 = vmatpush.bf16.msra.mxu0 0
      %273 = vmatpush.bf16.msra.mxu0 %v260
      %274 = vmatpush.bf16.msra.mxu0 %v259
      %275 = vmatpush.bf16.msra.mxu0 %v258
      %276 = vmatpush.bf16.msra.mxu0 %v257
      %277 = vmatmul.bf16.gmra.mxu0 %v267
      %v278 = vpop.f32.mrf.mxu0
      %v279 = vadd.f32 0.0, %v278
      %v280 = vpop.f32.mrf.mxu0
      %v281 = vadd.f32 0.0, %v280
      %282 = vdwg.mxu0
      %v291 = vunpack.c.l.b16 %v203
      %v292 = vunpack.c.l.b16 %v204
      %v293 = vunpack.c.l.b16 %v205
      %v294 = vunpack.c.l.b16 %v206
      %v295 = vunpack.c.l.b16 %v207
      %v296 = vunpack.c.l.b16 %v208
      %v297 = vunpack.c.l.b16 %v209
      %v298 = vunpack.c.l.b16 %v210
      %v299 = vpack.c.b16 %v292, %v291
      %v300 = vpack.c.b16 %v294, %v293
      %v301 = vpack.c.b16 %v296, %v295
      %v302 = vpack.c.b16 %v298, %v297
      %v307 = vsel %vm265, %v226, 0
      %309 = vmatpush.bf16.msra.mxu0 0
      %310 = vmatpush.bf16.msra.mxu0 0
      %311 = vmatpush.bf16.msra.mxu0 0
      %312 = vmatpush.bf16.msra.mxu0 0
      %313 = vmatpush.bf16.msra.mxu0 %v302
      %314 = vmatpush.bf16.msra.mxu0 %v301
      %315 = vmatpush.bf16.msra.mxu0 %v300
      %316 = vmatpush.bf16.msra.mxu0 %v299
      %317 = vmatmul.bf16.gmra.mxu0 %v307
      %v318 = vpop.f32.mrf.mxu0
      %v319 = vadd.f32 %v279, %v318
      %v320 = vpop.f32.mrf.mxu0
      %v321 = vadd.f32 %v281, %v320
      %322 = vdwg.mxu0
      %s323 = scalar_lea.vmem %s1, 64
      %v324 = vld [vmem:[%s323] sm:$0xf]
      %v325 = vld [vmem:[%s323 + $0x4] sm:$0xf]
      %v326 = vld [vmem:[%s323 + $0x8] sm:$0xf]
      %v327 = vld [vmem:[%s323 + $0xc] sm:$0xf]
      %v328 = vld [vmem:[%s323 + $0x10] sm:$0xf]
      %v329 = vld [vmem:[%s323 + $0x14] sm:$0xf]
      %v330 = vld [vmem:[%s323 + $0x18] sm:$0xf]
      %v331 = vld [vmem:[%s323 + $0x1c] sm:$0xf]
      %vm332 = vcmask 1046528
      %v333 = vrot.slane %v226, 1
      %v334 = vrot.slane %v227, 1
      %v335 = vsel %vm332, %v333, %v334
      %v344 = vunpack.c.l.b16 %v324
      %v345 = vunpack.c.l.b16 %v325
      %v346 = vunpack.c.l.b16 %v326
      %v347 = vunpack.c.l.b16 %v327
      %v348 = vunpack.c.l.b16 %v328
      %v349 = vunpack.c.l.b16 %v329
      %v350 = vunpack.c.l.b16 %v330
      %v351 = vunpack.c.l.b16 %v331
      %v352 = vpack.c.b16 %v345, %v344
      %v353 = vpack.c.b16 %v347, %v346
      %v354 = vpack.c.b16 %v349, %v348
      %v355 = vpack.c.b16 %v351, %v350
      %v361 = vsel %vm265, %v335, 0
      %363 = vmatpush.bf16.msra.mxu0 0
      %364 = vmatpush.bf16.msra.mxu0 0
      %365 = vmatpush.bf16.msra.mxu0 0
      %366 = vmatpush.bf16.msra.mxu0 0
      %367 = vmatpush.bf16.msra.mxu0 %v355
      %368 = vmatpush.bf16.msra.mxu0 %v354
      %369 = vmatpush.bf16.msra.mxu0 %v353
      %370 = vmatpush.bf16.msra.mxu0 %v352
      %371 = vmatmul.bf16.gmra.mxu0 %v361
      %v372 = vpop.f32.mrf.mxu0
      %v373 = vadd.f32 0.0, %v372
      %v374 = vpop.f32.mrf.mxu0
      %v375 = vadd.f32 0.0, %v374
      %376 = vdwg.mxu0
      %v377 = vadd.f32 %v319, %v373
      %v378 = vadd.f32 %v321, %v375
      %v379 = vld [vmem:[%s2] sm:$0x1]
      %v381 = vperm.slane %v379, 0
      %v383 = vadd.f32 %v377, %v381
      %v384 = vadd.f32 %v378, %v381
      %v385 = vxor.u32 %v383, 2147483648
      %v386 = vxor.u32 %v384, 2147483648
      %v387 = vmul.f32 %v385, 1.442695
      %v388 = vpow.pop %v387
      %v389 = vmul.f32 %v386, 1.442695
      %v390 = vpow.pop %v389
      %v391 = vadd.f32 %v388, 1.0
      %v392 = vadd.f32 %v390, 1.0
      %v393 = vrcp.pop %v391
      %v394 = vmul.f32 %v391, %v393
      %v395 = vsub.f32 1.0, %v394
      %v396 = vmul.f32 %v393, %v395
      %v397 = vadd.f32 %v393, %v396
      %vm398 = vweird.f32 %v391
      %vm399 = vweird.f32 %v393
      %vm400 = vmor %vm398, %vm399
      %v401 = vsel %vm400, %v393, %v397
      %v402 = vand.u32 2147483647, %v391
      %vm403 = vcmp.eq.f32.partialorder %v402, 8.507059e+37
      %v404 = vand.u32 %v391, 2147483648
      %v405 = vor.u32 1.1754944e-38, %v404
      %v406 = vsel %vm403, %v405, %v401
      %v407 = vmul.f32 1.0, %v406
      %v408 = vrcp.pop %v392
      %v409 = vmul.f32 %v392, %v408
      %v410 = vsub.f32 1.0, %v409
      %v411 = vmul.f32 %v408, %v410
      %v412 = vadd.f32 %v408, %v411
      %vm413 = vweird.f32 %v392
      %vm414 = vweird.f32 %v408
      %vm415 = vmor %vm413, %vm414
      %v416 = vsel %vm415, %v408, %v412
      %v417 = vand.u32 2147483647, %v392
      %vm418 = vcmp.eq.f32.partialorder %v417, 8.507059e+37
      %v419 = vand.u32 %v392, 2147483648
      %v420 = vor.u32 1.1754944e-38, %v419
      %v421 = vsel %vm418, %v420, %v416
      %v422 = vmul.f32 1.0, %v421
      %v423 = vmul.f32 %v383, %v407
      %v424 = vmul.f32 %v384, %v422
      %v425 = vpack.c.bf16 %v423, %v423
      %v426 = vpack.c.bf16 %v424, %v424
      %427 = vst [vmem:[%s192] sm:$0xf] %v425
      %428 = vst [vmem:[%s192 + $0x4] sm:$0xf] %v426
      %s429 = smul.u32 2, %s19
      %p430 = scmp.lt.s32.totalorder %s18, 1
      %s431 = scalar_select %p430, %s18, 1
      %p432 = scmp.lt.s32.totalorder %s429, 1
      %s433 = scalar_select %p432, %s429, 1
      %s434 = smul.addr %s431, 2
      %s435 = sadd.s32 %s433, %s434
      %s436 = smul.addr %s435, 4
      %s437 = scalar_lea.vmem %s3, %s436
      // Predicated region
      $region33: #{conv_bn_silu.1} parent=31 // pred_check
        %p438 = pneg %p114
      $region34: #{conv_bn_silu.1} parent=31 // pred_check_branch
        %440 = sbr.rel (%p438) target = $region36
      $region35: #{conv_bn_silu.1} parent=31 // pred_region
        %s441 = smul.u32 2, %s19
      $region36: #{conv_bn_silu.1} parent=31 // pred_fallthru
        _
    $region32: #{conv_bn_silu.1} parent=5 // pred_fallthru
      _
    %p442 = scmp.le.s32.totalorder 2, %s9
    // Predicated region
    $region37: #{conv_bn_silu.1} parent=5 // pred_check
      %p443 = pneg %p442
    $region38: #{conv_bn_silu.1} parent=5 // pred_check_branch
      %445 = sbr.rel (%p443) target = $region40
    $region39: #{conv_bn_silu.1} parent=5 // pred_region
      %s446 = ssub.s32 %s9, 2
      // Predicated region
      $region41: #{conv_bn_silu.1} parent=39 // pred_check
        %p447 = pneg %p120
      $region42: #{conv_bn_silu.1} parent=39 // pred_check_branch
        %449 = sbr.rel (%p447) target = $region44
      $region43: #{conv_bn_silu.1} parent=39 // pred_region
        %s450 = smul.u32 2, %s21
        %p451 = scmp.lt.s32.totalorder %s20, 1
        %s452 = scalar_select %p451, %s20, 1
        %p453 = scmp.lt.s32.totalorder %s450, 1
        %s454 = scalar_select %p453, %s450, 1
        %s455 = smul.addr %s452, 2
        %s456 = sadd.s32 %s454, %s455
        %s457 = smul.addr %s456, 4
        %s458 = scalar_lea.vmem %s3, %s457
      $region44: #{conv_bn_silu.1} parent=39 // pred_fallthru
        _
    $region40: #{conv_bn_silu.1} parent=5 // pred_fallthru
      _
  $region6: #{conv_bn_silu.1} parent=0 // loop_footer
    %s13 = sadd.s32 1, %s9
  $region7: #{conv_bn_silu.1} parent=0 // loop_footer_branch
    %8 = sbr.rel target = $region3
  $region8: #{conv_bn_silu.1} parent=0 // loop_exit
    _

</llo_original>
